<compile_context>
chip_gen: v7x
topology: tpu7x:2x2x1
jax: 0.10.0
libtpu: 0.0.40
codegen_flags: <defaults>
</compile_context>

<pallas_src>
import functools

import jax
import jax.numpy as jnp
from jax.experimental import pallas as pl
from jax.experimental.pallas import tpu as pltpu


# --------------------------------------------------------------------------- #
# Kernel
# --------------------------------------------------------------------------- #
def _luong_general_kernel(p_ref, states_ref, out_ref, *, approx_recip):
    # MXU contraction over K = B*H:
    #   energies[s, b] = sum_{b',h} states2d[s, b'*H + h] * P[b'*H + h, b]
    #                  = sum_h states[s, b, h] * (last_state @ W^T)[b, h]
    energies = jax.lax.dot_general(
        states_ref[...], p_ref[...],
        dimension_numbers=(((1,), (0,)), ((), ())),
        preferred_element_type=jnp.float32,
    )                                                         # (tS, B), f32

    # F.softmax with implicit dim on a 2-D tensor => softmax over dim=1 (batch),
    # faithfully reproducing the PyTorch module.  Each S-row is independent, so
    # tiling over S never splits a softmax.
    m = jnp.max(energies, axis=1, keepdims=True)
    e = jnp.exp(energies - m)
    denom = jnp.sum(e, axis=1, keepdims=True)
    if approx_recip:
        attn = e * pl.reciprocal(denom, approx=True)          # EUP slot, ~free
    else:
        attn = e / denom

    # Lane-dense store: (B, tS) puts tS on the 128-wide lane axis.  Transposing
    # the small (tS, B) result costs <= tS/8 vregs of XLU work, hidden under DMA.
    out_ref[...] = attn.T.astype(out_ref.dtype)


# --------------------------------------------------------------------------- #
# Sizing helpers
# --------------------------------------------------------------------------- #
def _ceil_to(x, m):
    return -(-x // m) * m


def _padded_bytes(rows, cols, itemsize):
    """f32-native (8,128) tile-padded VMEM footprint of a (rows, cols) buffer."""
    return _ceil_to(max(rows, 1), 8) * _ceil_to(max(cols, 1), 128) * itemsize


def _vmem_capacity_bytes():
    try:
        return int(pltpu.get_tpu_info().vmem_capacity_bytes)
    except Exception:
        return 64 << 20                      # conservative: v7x per-TC VMEM


def _pick_tile_s(S, bh, itemsize, per_buffer_bytes, max_rows=4096):
    """Largest multiple of 128 dividing S under byte & row caps; else one block."""
    row_bytes = bh * itemsize
    cap = max(1, per_buffer_bytes // row_bytes)
    cap = min(cap, max_rows, S)
    t = (cap // 128) * 128
    while t >= 128:
        if S % t == 0:
            return t
        t -= 128
    # TODO(synk): ragged S with no 128-multiple divisor falls back to one full block;
    # a masked tail tile would be needed for huge, oddly-sized S.
    return S


def _vmem_limit_bytes(tile_s, B, bh, in_itemsize, n_buf, cap_bytes):
    need = (
        n_buf * _padded_bytes(tile_s, bh, in_itemsize)   # streamed states buffers
        + 2 * _padded_bytes(B, tile_s, 4)                # double-buffered output tiles
        + 2 * _padded_bytes(bh, B, 4)                    # resident P (counted x2)
        + 4 * _padded_bytes(tile_s, 128, 4)              # energies/exp/denom temporaries
        + _padded_bytes(B, tile_s, 4)                    # transposed attention temp
    )
    # 2x margin for Mosaic internal scratch; floor at the 32 MiB scoped default,
    # cap at 3/4 of physical VMEM (=> ~48 MiB on v7x, ~96 MiB on v5e/v6e).
    return int(min(max(2 * need, min(32 << 20, cap_bytes)), cap_bytes))


def _states_block_spec(tile_s, bh, want_buffers):
    index_map = lambda i: (i, 0)
    if want_buffers > 2:
        try:
            return (pl.BlockSpec((tile_s, bh), index_map,
                                 pipeline_mode=pl.Buffered(want_buffers)),
                    want_buffers)
        except TypeError:     # older jax without pipeline_mode kwarg
            pass
    return pl.BlockSpec((tile_s, bh), index_map), 2


# --------------------------------------------------------------------------- #
# Wrapper
# --------------------------------------------------------------------------- #
def luong_attention_general(last_state, states, projection, *, tile_s=None,
                            approx_recip=True):
    """last_state: (B, H) f32, states: (S, B, H) f32/bf16, projection: (H, H) f32 -> (S, B) f32."""
    S, B, H = states.shape
    bh = B * H
    in_itemsize = jnp.dtype(states.dtype).itemsize

    # ---- one-off O(B*H*H) projection fold (hoisted out of the kernel) ---------
    plast = jnp.einsum("bh,kh->bk", last_state.astype(jnp.float32),
                       projection.astype(jnp.float32))           # last @ W^T, (B, H)
    # Block-diagonal fold of projection + batch selection: P[b*H+h, c] = plast[b,h]*(b==c)
    P = (plast[:, :, None] * jnp.eye(B, dtype=jnp.float32)[:, None, :]).reshape(bh, B)
    if states.dtype == jnp.bfloat16:
        P = P.astype(jnp.bfloat16)          # keep the MXU on its native bf16 path

    # ---- dense 2-D view of states (free, contiguous reshape) ------------------
    states2d = states.reshape(S, bh)

    # ---- tiling / VMEM budget --------------------------------------------------
    vmem_cap = _vmem_capacity_bytes()
    per_buffer_bytes = (4 << 20) if vmem_cap <= (64 << 20) else (8 << 20)
    if tile_s is None:
        tile_s = _pick_tile_s(S, bh, in_itemsize, per_buffer_bytes)
    assert S % tile_s == 0 and (tile_s % 128 == 0 or tile_s == S), (S, tile_s)
    grid_len = S // tile_s

    want_buffers = 3 if (grid_len >= 3 and tile_s * bh * in_itemsize <= (4 << 20)) else 2
    states_spec, n_buf = _states_block_spec(tile_s, bh, want_buffers)

    vmem_limit = _vmem_limit_bytes(tile_s, B, bh, in_itemsize, n_buf,
                                   (vmem_cap * 3) // 4)

    out_t = pl.pallas_call(
        functools.partial(_luong_general_kernel, approx_recip=approx_recip),
        out_shape=jax.ShapeDtypeStruct((B, S), jnp.float32),
        grid_spec=pltpu.PrefetchScalarGridSpec(
            num_scalar_prefetch=0,
            grid=(grid_len,),
            in_specs=[
                pl.BlockSpec((bh, B), lambda i: (0, 0)),      # resident folded projection
                states_spec,                                  # streamed dense states
            ],
            out_specs=pl.BlockSpec((B, tile_s), lambda i: (0, i)),  # lane-dense (B, tS)
        ),
        compiler_params=pltpu.CompilerParams(
            dimension_semantics=("parallel",),
            vmem_limit_bytes=vmem_limit,
        ),
    )(P, states2d)

    return out_t.T                                            # (S, B)


# --------------------------------------------------------------------------- #
# Pure-JAX reference mirroring the PyTorch forward (mode='general', mask=None)
# --------------------------------------------------------------------------- #
def _reference(last_state, states, projection):
    proj = jnp.einsum("sbh,hk->sbk", states, projection)
    energies = jnp.sum(last_state[None] * proj, axis=2)       # (S, B)
    return jax.nn.softmax(energies, axis=1)                   # implicit dim=1 (batch)


if __name__ == "__main__":
    # TODO(synk): mask path skipped — the reference only applies it when the mask is a
    # torch.autograd.Variable, which never triggers for the default mask=None call.
    key = jax.random.PRNGKey(0)

    # --- small shape consistent with the module (seq=8, batch=2, hidden=32) --------
    S, B, H = 8, 2, 32
    k1, k2, k3 = jax.random.split(key, 3)
    states = jax.random.normal(k1, (S, B, H), dtype=jnp.float32)
    last_state = jax.random.normal(k2, (B, H), dtype=jnp.float32)
    # nn.Parameter(torch.FloatTensor(H, H)) is uninitialized in the module;
    # initialize deterministically here.
    projection = jax.random.normal(k3, (H, H), dtype=jnp.float32) / jnp.sqrt(H)

    ref = _reference(last_state, states, projection)

    out_exact = jax.block_until_ready(
        luong_attention_general(last_state, states, projection, approx_recip=False))
    assert out_exact.shape == (S, B)
    assert jnp.allclose(out_exact, ref, atol=1e-3, rtol=1e-3), "exact path mismatch"

    out_approx = jax.block_until_ready(
        luong_attention_general(last_state, states, projection, approx_recip=True))
    # EUP approximate reciprocal trades ~1e-4 relative error for a free VLIW slot.
    assert jnp.allclose(out_approx, ref, atol=2e-3, rtol=2e-3), "approx path mismatch"

    # --- multi-tile grid path (pipelining, Buffered(3), lane-dense transposed store)
    S2, B2, H2 = 512, 8, 128
    k4, k5, k6 = jax.random.split(jax.random.PRNGKey(1), 3)
    states2 = jax.random.normal(k4, (S2, B2, H2), dtype=jnp.float32)
    last2 = jax.random.normal(k5, (B2, H2), dtype=jnp.float32)
    proj2 = jax.random.normal(k6, (H2, H2), dtype=jnp.float32) / jnp.sqrt(H2)

    out2 = jax.block_until_ready(
        luong_attention_general(last2, states2, proj2, tile_s=128))
    ref2 = _reference(last2, states2, proj2)
    assert out2.shape == (S2, B2)
    assert jnp.allclose(out2, ref2, atol=2e-3, rtol=2e-3), "tiled path mismatch"

    # --- auto tile selection on the larger shape -----------------------------------
    out2b = jax.block_until_ready(luong_attention_general(last2, states2, proj2))
    assert jnp.allclose(out2b, ref2, atol=2e-3, rtol=2e-3), "auto-tile path mismatch"

    # --- optional bf16-streamed states (halves HBM traffic; numerics are looser) ---
    states2_bf = states2.astype(jnp.bfloat16)
    out_bf = jax.block_until_ready(
        luong_attention_general(last2, states2_bf, proj2, tile_s=128))
    ref_bf = _reference(last2, states2_bf.astype(jnp.float32), proj2)
    assert jnp.allclose(out_bf, ref_bf, atol=3e-2, rtol=3e-2), "bf16 path mismatch"

    print("KERNEL_OK")
</pallas_src>

<mosaic_0001>
module attributes {stable_mosaic.version = 11 : i64} {
  func.func @_luong_general_kernel(%arg0: i32, %arg1: memref<64x2xf32, #tpu.memory_space<vmem>>, %arg2: memref<8x64xf32, #tpu.memory_space<vmem>>, %arg3: memref<2x8xf32, #tpu.memory_space<vmem>>) attributes {dimension_semantics = [#tpu.dimension_semantics<parallel>], iteration_bounds = array<i64: 1>, scalar_prefetch = 0 : i64, scratch_operands = 0 : i64, tpu.core_type = #tpu.core_type<tc>, window_params = [{pipeline_mode = #tpu.pipeline_mode<synchronous>, transform_indices = @transform_0, window_bounds = array<i64: 64, 2>}, {transform_indices = @transform_1, window_bounds = array<i64: 8, 64>}, {transform_indices = @transform_2, window_bounds = array<i64: 2, 8>}]} {
    %c0 = arith.constant 0 : index
    %c0_0 = arith.constant 0 : index
    %0 = vector.load %arg2[%c0, %c0_0] : memref<8x64xf32, #tpu.memory_space<vmem>>, vector<8x64xf32>
    %c0_1 = arith.constant 0 : index
    %c0_2 = arith.constant 0 : index
    %1 = vector.load %arg1[%c0_1, %c0_2] : memref<64x2xf32, #tpu.memory_space<vmem>>, vector<64x2xf32>
    %cst = arith.constant dense<0.000000e+00> : vector<8x2xf32>
    %2 = tpu.matmul %0, %1, %cst {dimension_numbers = #tpu.dot_dimension_numbers<[1], [0], [0], [1], [0, 0, 1, 1], [], []>} : vector<8x64xf32>, vector<64x2xf32>, vector<8x2xf32> -> vector<8x2xf32>
    %cst_3 = arith.constant dense<0xFF800000> : vector<8xf32>
    %3 = vector.multi_reduction <maximumf>, %2, %cst_3 [1] : vector<8x2xf32> to vector<8xf32>
    %4 = vector.shape_cast %3 : vector<8xf32> to vector<8x1xf32>
    %5 = vector.broadcast %4 : vector<8x1xf32> to vector<8x2xf32>
    %6 = arith.subf %2, %5 : vector<8x2xf32>
    %7 = math.exp %6 : vector<8x2xf32>
    %cst_4 = arith.constant dense<0.000000e+00> : vector<8xf32>
    %8 = vector.multi_reduction <add>, %7, %cst_4 [1] : vector<8x2xf32> to vector<8xf32>
    %9 = vector.shape_cast %8 : vector<8xf32> to vector<8x1xf32>
    %10 = vector.broadcast %9 : vector<8x1xf32> to vector<8x2xf32>
    %11 = arith.divf %7, %10 : vector<8x2xf32>
    %12 = tpu.transpose %11, [1, 0] : vector<8x2xf32> -> vector<2x8xf32>
    %c0_5 = arith.constant 0 : index
    %c0_6 = arith.constant 0 : index
    %13 = vector.load %arg3[%c0_5, %c0_6] : memref<2x8xf32, #tpu.memory_space<vmem>>, vector<2x8xf32>
    tpu.vector_store %arg3[%c0_5, %c0_6], %12 {strides = array<i32>} : memref<2x8xf32, #tpu.memory_space<vmem>>, vector<2x8xf32>,
    return
  }
  func.func @transform_0(%arg0: i32) -> (i32, i32) {
    %c0_i32 = arith.constant 0 : i32
    %c0_i32_0 = arith.constant 0 : i32
    %c0_i32_1 = arith.constant 0 : i32
    return %c0_i32, %c0_i32_0 : i32, i32
  }
  func.func @transform_1(%arg0: i32) -> (i32, i32) {
    %c0_i32 = arith.constant 0 : i32
    %c0_i32_0 = arith.constant 0 : i32
    return %arg0, %c0_i32 : i32, i32
  }
  func.func @transform_2(%arg0: i32) -> (i32, i32) {
    %c0_i32 = arith.constant 0 : i32
    %c0_i32_0 = arith.constant 0 : i32
    return %c0_i32, %arg0 : i32, i32
  }
}

</mosaic_0001>

<llo_original>
// kernel: tpu_custom_call.1
$region0: #{tpu_custom_call.1}
  #allocation0 [shape = 'u32[]', space=smem, size = 0x4, offset = 0x4, fixed_abs, tag = 'smem constant byte address 0x4 - core index']
  #allocation1 [shape = 'u32[144,128]{1,0:T(1,128)}', space=vmem, size = 0x12000, scoped, tag = 'internal scratch']
  %s0 = inlined_call_operand.vmem [shape: f32[64,2], index: 0, kind: input, shape index: {}]
  %s1 = inlined_call_operand.vmem [shape: f32[8,64], index: 1, kind: input, shape index: {}]
  %s2 = inlined_call_operand.hbm [shape: f32[2,8], index: 2, kind: output, shape index: {}]
  %s3 = sld [smem:[#allocation0]]
  $region18: #{tpu_custom_call.1} parent=0
    _
  %s5 = ssub.s32 1, %s3
  %s6 = scalar_select 0, %s5, %s3
  $region1: #{tpu_custom_call.1} parent=0
    #allocation2 [shape = 'u8[1024]{0}', space=vmem, size = 0x400, scoped, tag = 'output window, operand 0, single buffered']
    #allocation3 [shape = 's32[1]{0}', space=sflag, size = 0x4, scoped, tag = 'scoped memory for tpu_custom_call.1']
    %7 = vsyncpa [#allocation3], 0
    // Predicated region
    $region2: #{tpu_custom_call.1} parent=1 // pred_check
      _
    $region3: #{tpu_custom_call.1} parent=1 // pred_check_branch
      %9 = sbr.rel (0) target = $region5
    $region4: #{tpu_custom_call.1} parent=1 // pred_region
      _
    $region5: #{tpu_custom_call.1} parent=1 // pred_fallthru
      _
    // Predicated region
    $region6: #{tpu_custom_call.1} parent=1 // pred_check
      _
    $region7: #{tpu_custom_call.1} parent=1 // pred_check_branch
      %11 = sbr.rel (0) target = $region9
    $region8: #{tpu_custom_call.1} parent=1 // pred_region
      _
    $region9: #{tpu_custom_call.1} parent=1 // pred_fallthru
      _
    %v12 = vld [vmem:[%s1] sm:$0xff]
    %v13 = vld [vmem:[%s0] sm:$0xff]
    %v14 = vld [vmem:[%s0 + $0x8] sm:$0xff]
    %v15 = vld [vmem:[%s0 + $0x10] sm:$0xff]
    %v16 = vld [vmem:[%s0 + $0x18] sm:$0xff]
    %v17 = vld [vmem:[%s0 + $0x20] sm:$0xff]
    %v18 = vld [vmem:[%s0 + $0x28] sm:$0xff]
    %v19 = vld [vmem:[%s0 + $0x30] sm:$0xff]
    %v20 = vld [vmem:[%s0 + $0x38] sm:$0xff]
    %vm21 = vcmask 523264
    %v23 = vsel %vm21, %v12, 0
    %25 = vmatprep.subr.mxu0 0.0
    %26 = vmatpush1.msra.mxu0 %v13
    %27 = vmatprep.subr.mxu0 0.0
    %28 = vmatpush1.msra.mxu0 %v14
    %29 = vmatprep.subr.mxu0 0.0
    %30 = vmatpush1.msra.mxu0 %v15
    %31 = vmatprep.subr.mxu0 0.0
    %32 = vmatpush1.msra.mxu0 %v16
    %33 = vmatprep.subr.mxu0 0.0
    %34 = vmatpush1.msra.mxu0 %v17
    %35 = vmatprep.subr.mxu0 0.0
    %36 = vmatpush1.msra.mxu0 %v18
    %37 = vmatprep.subr.mxu0 0.0
    %38 = vmatpush1.msra.mxu0 %v19
    %39 = vmatprep.subr.mxu0 0.0
    %40 = vmatpush1.msra.mxu0 %v20
    %41 = vmatprep.subr.mxu0 0.0
    %42 = vmatpush1.msra.mxu0 0.0
    %43 = vmatprep.subr.mxu0 0.0
    %44 = vmatpush1.msra.mxu0 0.0
    %45 = vmatprep.subr.mxu0 0.0
    %46 = vmatpush1.msra.mxu0 0.0
    %47 = vmatprep.subr.mxu0 0.0
    %48 = vmatpush1.msra.mxu0 0.0
    %49 = vmatprep.subr.mxu0 0.0
    %50 = vmatpush1.msra.mxu0 0.0
    %51 = vmatprep.subr.mxu0 0.0
    %52 = vmatpush1.msra.mxu0 0.0
    %53 = vmatprep.subr.mxu0 0.0
    %54 = vmatpush1.msra.mxu0 0.0
    %55 = vmatprep.subr.mxu0 0.0
    %56 = vmatpush1.msra.mxu0 0.0
    %57 = vmatprep.subr.mxu0 0.0
    %58 = vmatpush1.msra.mxu0 0.0
    %59 = vmatprep.subr.mxu0 0.0
    %60 = vmatpush1.msra.mxu0 0.0
    %61 = vmatprep.subr.mxu0 0.0
    %62 = vmatpush1.msra.mxu0 0.0
    %63 = vmatprep.subr.mxu0 0.0
    %64 = vmatpush1.msra.mxu0 0.0
    %65 = vmatprep.subr.mxu0 0.0
    %66 = vmatpush1.msra.mxu0 0.0
    %67 = vmatprep.subr.mxu0 0.0
    %68 = vmatpush1.msra.mxu0 0.0
    %69 = vmatprep.subr.mxu0 0.0
    %70 = vmatpush1.msra.mxu0 0.0
    %71 = vmatprep.subr.mxu0 0.0
    %72 = vmatpush1.msra.mxu0 0.0
    %73 = vmatprep.subr.mxu0 0.0
    %74 = vmatpush1.msra.mxu0 0.0
    %75 = vmatprep.subr.mxu0 0.0
    %76 = vmatpush1.msra.mxu0 0.0
    %77 = vmatprep.subr.mxu0 0.0
    %78 = vmatpush1.msra.mxu0 0.0
    %79 = vmatprep.subr.mxu0 0.0
    %80 = vmatpush1.msra.mxu0 0.0
    %81 = vmatprep.subr.mxu0 0.0
    %82 = vmatpush1.msra.mxu0 0.0
    %83 = vmatprep.subr.mxu0 0.0
    %84 = vmatpush1.msra.mxu0 0.0
    %85 = vmatprep.subr.mxu0 0.0
    %86 = vmatpush1.msra.mxu0 0.0
    %87 = vmatprep.subr.mxu0 0.0
    %88 = vmatpush1.msra.mxu0 0.0
    %89 = vmatprep.mubr.f32.mxu0 0.0
    %90 = vmatmul.mubr.f32.gmra.mrb[0].mxu0 %v23
    %v91 = vpop.f32.mrb[0].mxu0
    %v92 = vadd.f32 0.0, %v91
    %v93 = vpop.f32.mrb[0].mxu0
    %94 = vdwg.mxu0
    %vm95 = vcmask 15360
    %v96 = vsel %vm95, %v92, -inf
    %97 = vmax.xlane.f32.xlu0 %v96
    %v98 = vpop.xlane.xlu0 %97
    %v99 = vsub.f32 %v92, %v98
    %v100 = vmul.f32 %v99, 1.442695
    %v101 = vpow.pop %v100
    %v102 = vsel %vm95, %v101, 0.0
    %103 = vadd.xlane.f32.xlu0 %v102
    %v104 = vpop.xlane.xlu0 %103
    %v105 = vrcp.pop %v104
    %v106 = vmul.f32 %v101, %v105
    %107 = vxpose.xlu0.b32.start [1/16] %v106, 128
    %108 = vxpose.xlu0.b32.cont [2/16] 0.0, 128
    %109 = vxpose.xlu0.b32.cont [3/16] 0.0, 128
    %110 = vxpose.xlu0.b32.cont [4/16] 0.0, 128
    %111 = vxpose.xlu0.b32.cont [5/16] 0.0, 128
    %112 = vxpose.xlu0.b32.cont [6/16] 0.0, 128
    %113 = vxpose.xlu0.b32.cont [7/16] 0.0, 128
    %114 = vxpose.xlu0.b32.cont [8/16] 0.0, 128
    %115 = vxpose.xlu0.b32.cont [9/16] 0.0, 128
    %116 = vxpose.xlu0.b32.cont [10/16] 0.0, 128
    %117 = vxpose.xlu0.b32.cont [11/16] 0.0, 128
    %118 = vxpose.xlu0.b32.cont [12/16] 0.0, 128
    %119 = vxpose.xlu0.b32.cont [13/16] 0.0, 128
    %120 = vxpose.xlu0.b32.cont [14/16] 0.0, 128
    %121 = vxpose.xlu0.b32.cont [15/16] 0.0, 128
    %122 = vxpose.xlu0.b32.end [16/16] 0.0, 128
    %v123 = vpop.trf.xlu0
    %v124 = vpop.trf.xlu0
    %v125 = vpop.trf.xlu0
    %v126 = vpop.trf.xlu0
    %v127 = vpop.trf.xlu0
    %v128 = vpop.trf.xlu0
    %v129 = vpop.trf.xlu0
    %v130 = vpop.trf.xlu0
    %v131 = vpop.trf.xlu0
    %v132 = vpop.trf.xlu0
    %v133 = vpop.trf.xlu0
    %v134 = vpop.trf.xlu0
    %v135 = vpop.trf.xlu0
    %v136 = vpop.trf.xlu0
    %v137 = vpop.trf.xlu0
    %v138 = vpop.trf.xlu0
    %vm139 = vcmask 58368
    %140 = vst.msk [vmem:[#allocation2] sm:$0x3] %vm139, %v123
    // Predicated region
    $region10: #{tpu_custom_call.1} parent=1 // pred_check
      _
    $region11: #{tpu_custom_call.1} parent=1 // pred_check_branch
      %142 = sbr.rel (0) target = $region13
    $region12: #{tpu_custom_call.1} parent=1 // pred_region
      %s144 = ssub.s32 32, 32
      %145 = vsyncadd [#allocation3], %s144
      %s147 = sshll.u32 [#allocation2], 4
      %s148 = int_to_ptr.vmem [resolvable:$true] %s147
      %150 = dma.vmem_to_hbm [thread:$0]  %s148, 32, %s2, [#allocation3]
    $region13: #{tpu_custom_call.1} parent=1 // pred_fallthru
      _
    // Predicated region
    $region14: #{tpu_custom_call.1} parent=1 // pred_check
      _
    $region15: #{tpu_custom_call.1} parent=1 // pred_check_branch
      %152 = sbr.rel (0) target = $region17
    $region16: #{tpu_custom_call.1} parent=1 // pred_region
      %153 = dma.done [#allocation3], 32
    $region17: #{tpu_custom_call.1} parent=1 // pred_fallthru
      _
    %154 = vsyncpa [#allocation3], 1

</llo_original>
